<compile_context>
chip_gen: v5e
topology: v5e:2x2
jax: 0.10.0
libtpu: 0.0.40
codegen_flags: <defaults>
</compile_context>

<pallas_src>
import functools

import jax
import jax.numpy as jnp
from jax.experimental import pallas as pl
from jax.experimental.pallas import tpu as pltpu

LANE = 128
SUBLANE = 8


def _round_up(n, m):
    return ((n + m - 1) // m) * m


def residual_block_kernel(x_ref, w1c_ref, b1c_ref, w2_ref, b2_ref, o_ref, *, f_out_p):
    """One batch tile: fused (linear1|skip) matmul, LeakyReLU, linear2, residual add."""
    x = x_ref[...]

    def leaky_relu(v):
        return jnp.where(v > 0, v, 0.1 * v)

    # One wide matmul for both x-side GEMMs:  x @ [W1'(bn-folded) | Ws]  (+ [b1' | bs])
    hc = jnp.dot(x, w1c_ref[...], preferred_element_type=jnp.float32) + b1c_ref[...]
    h = leaky_relu(hc[:, :f_out_p])   # linear1 -> bn1(folded) -> LeakyReLU
    identity = hc[:, f_out_p:]        # skip path (Linear, since in_features != out_features)

    # dropout: identity (eval mode)

    # linear2 -> bn2(folded) -> + skip -> LeakyReLU
    out = (jnp.dot(h.astype(w2_ref.dtype), w2_ref[...],
                   preferred_element_type=jnp.float32)
           + b2_ref[...] + identity)
    o_ref[...] = leaky_relu(out).astype(o_ref.dtype)


def residual_block(x, params, eps=1e-5, *, tile_b=256,
                   mxu_dtype=jnp.float32, out_dtype=jnp.float32):
    B, f_in = x.shape
    f_out = params["w1"].shape[1]

    f_in_p = _round_up(f_in, LANE)
    f_out_p = _round_up(f_out, LANE)

    # --- Fold BatchNorm (running stats) into the preceding Linear ------------------
    def fold(w, b, gamma, beta, mean, var):
        scale = gamma / jnp.sqrt(var + eps)          # [F_out]
        return w * scale[None, :], b * scale + (beta - mean * scale)

    w1f, b1f = fold(params["w1"], params["b1"], params["bn1_gamma"],
                    params["bn1_beta"], params["bn1_mean"], params["bn1_var"])
    w2f, b2f = fold(params["w2"], params["b2"], params["bn2_gamma"],
                    params["bn2_beta"], params["bn2_mean"], params["bn2_var"])
    ws, bs = params["ws"], params["bs"]

    # --- Zero-pad to lane-dense shapes (padding is exactly zero -> no leakage) -----
    def pad2(w, r, c):
        return jnp.pad(w, ((0, r - w.shape[0]), (0, c - w.shape[1])))

    def pad1(b, c):
        return jnp.pad(b, (0, c - b.shape[0]))

    # Concatenate main + skip weights along the output axis -> one wide GEMM on x.
    w1c = jnp.concatenate([pad2(w1f, f_in_p, f_out_p),
                           pad2(ws, f_in_p, f_out_p)], axis=1)          # [F_in_p, 2*F_out_p]
    b1c = jnp.concatenate([pad1(b1f, f_out_p), pad1(bs, f_out_p)])[None, :]
    w2p = pad2(w2f, f_out_p, f_out_p)                                    # [F_out_p, F_out_p]
    b2p = pad1(b2f, f_out_p)[None, :]

    # --- Batch tiling ---------------------------------------------------------------
    tile_b = min(tile_b, _round_up(B, SUBLANE))
    b_pad = _round_up(B, tile_b)
    xp = jnp.pad(x, ((0, b_pad - B), (0, f_in_p - f_in)))

    # MXU operand dtype (bf16 on v6e/v7x halves weight residency & doubles throughput;
    # accumulation stays f32 via preferred_element_type). Biases stay f32.
    xp = xp.astype(mxu_dtype)
    w1c = w1c.astype(mxu_dtype)
    w2p = w2p.astype(mxu_dtype)

    grid = (b_pad // tile_b,)
    kernel = functools.partial(residual_block_kernel, f_out_p=f_out_p)

    out = pl.pallas_call(
        kernel,
        out_shape=jax.ShapeDtypeStruct((b_pad, f_out_p), out_dtype),
        grid_spec=pltpu.PrefetchScalarGridSpec(
            num_scalar_prefetch=0,
            grid=grid,
            in_specs=[
                # x tile streams with the grid; weights/biases stay VMEM-resident.
                pl.BlockSpec((tile_b, f_in_p), lambda i: (i, 0)),
                pl.BlockSpec((f_in_p, 2 * f_out_p), lambda i: (0, 0)),
                pl.BlockSpec((1, 2 * f_out_p), lambda i: (0, 0)),
                pl.BlockSpec((f_out_p, f_out_p), lambda i: (0, 0)),
                pl.BlockSpec((1, f_out_p), lambda i: (0, 0)),
            ],
            out_specs=pl.BlockSpec((tile_b, f_out_p), lambda i: (i, 0)),
        ),
        compiler_params=pltpu.CompilerParams(
            dimension_semantics=("parallel",),
            vmem_limit_bytes=48 * 1024 * 1024,   # > default scoped limits, headroom on v7x
        ),
    )(xp, w1c, b1c, w2p, b2p)

    return out[:B, :f_out]


def init_params(key, in_features, out_features):
    """Deterministic parameter init (PyTorch-style uniform bounds)."""
    ks = jax.random.split(key, 6)

    def linear(kw, kb, fan_in, fan_out):
        bound = 1.0 / jnp.sqrt(fan_in)
        w = jax.random.uniform(kw, (fan_in, fan_out), jnp.float32, -bound, bound)
        b = jax.random.uniform(kb, (fan_out,), jnp.float32, -bound, bound)
        return w, b

    w1, b1 = linear(ks[0], ks[1], in_features, out_features)
    w2, b2 = linear(ks[2], ks[3], out_features, out_features)
    ws, bs = linear(ks[4], ks[5], in_features, out_features)

    return dict(
        w1=w1, b1=b1,
        bn1_gamma=jnp.ones((out_features,), jnp.float32),
        bn1_beta=jnp.zeros((out_features,), jnp.float32),
        bn1_mean=jnp.zeros((out_features,), jnp.float32),
        bn1_var=jnp.ones((out_features,), jnp.float32),
        w2=w2, b2=b2,
        bn2_gamma=jnp.ones((out_features,), jnp.float32),
        bn2_beta=jnp.zeros((out_features,), jnp.float32),
        bn2_mean=jnp.zeros((out_features,), jnp.float32),
        bn2_var=jnp.ones((out_features,), jnp.float32),
        ws=ws, bs=bs,
    )


def residual_block_ref(x, params, eps=1e-5):
    """Pure-JAX reference (unfused, unpadded) for correctness checking."""
    def bn(z, g, b, m, v):
        return (z - m) / jnp.sqrt(v + eps) * g + b

    def lrelu(v):
        return jnp.where(v > 0, v, 0.1 * v)

    identity = x @ params["ws"] + params["bs"]
    h = x @ params["w1"] + params["b1"]
    h = lrelu(bn(h, params["bn1_gamma"], params["bn1_beta"],
                 params["bn1_mean"], params["bn1_var"]))
    h = h @ params["w2"] + params["b2"]
    h = bn(h, params["bn2_gamma"], params["bn2_beta"],
           params["bn2_mean"], params["bn2_var"])
    return lrelu(h + identity)


if __name__ == "__main__":
    B, F_IN, F_OUT = 8, 16, 32

    key = jax.random.PRNGKey(0)
    k_x, k_p = jax.random.split(key)
    x = jax.random.normal(k_x, (B, F_IN), jnp.float32)
    params = init_params(k_p, F_IN, F_OUT)

    out = residual_block(x, params)
    out = jax.block_until_ready(out)

    ref = residual_block_ref(x, params)
    assert out.shape == (B, F_OUT)
    # BN folding + padded/concatenated GEMM introduce tiny fp32 rounding diffs.
    assert jnp.allclose(out, ref, atol=1e-4, rtol=1e-4), "mismatch vs reference"

    print("KERNEL_OK")
</pallas_src>

<mosaic_0001>
module attributes {stable_mosaic.version = 11 : i64} {
  func.func @residual_block_kernel(%arg0: i32, %arg1: memref<8x128xf32, #tpu.memory_space<vmem>>, %arg2: memref<128x256xf32, #tpu.memory_space<vmem>>, %arg3: memref<1x256xf32, #tpu.memory_space<vmem>>, %arg4: memref<128x128xf32, #tpu.memory_space<vmem>>, %arg5: memref<1x128xf32, #tpu.memory_space<vmem>>, %arg6: memref<8x128xf32, #tpu.memory_space<vmem>>) attributes {dimension_semantics = [#tpu.dimension_semantics<parallel>], iteration_bounds = array<i64: 1>, scalar_prefetch = 0 : i64, scratch_operands = 0 : i64, tpu.core_type = #tpu.core_type<tc>, window_params = [{transform_indices = @transform_0, window_bounds = array<i64: 8, 128>}, {pipeline_mode = #tpu.pipeline_mode<synchronous>, transform_indices = @transform_1, window_bounds = array<i64: 128, 256>}, {pipeline_mode = #tpu.pipeline_mode<synchronous>, transform_indices = @transform_2, window_bounds = array<i64: 1, 256>}, {pipeline_mode = #tpu.pipeline_mode<synchronous>, transform_indices = @transform_3, window_bounds = array<i64: 128, 128>}, {pipeline_mode = #tpu.pipeline_mode<synchronous>, transform_indices = @transform_4, window_bounds = array<i64: 1, 128>}, {transform_indices = @transform_5, window_bounds = array<i64: 8, 128>}]} {
    %c0 = arith.constant 0 : index
    %c0_0 = arith.constant 0 : index
    %0 = vector.load %arg1[%c0, %c0_0] : memref<8x128xf32, #tpu.memory_space<vmem>>, vector<8x128xf32>
    %c0_1 = arith.constant 0 : index
    %c0_2 = arith.constant 0 : index
    %1 = vector.load %arg2[%c0_1, %c0_2] : memref<128x256xf32, #tpu.memory_space<vmem>>, vector<128x256xf32>
    %cst = arith.constant dense<0.000000e+00> : vector<8x256xf32>
    %2 = tpu.matmul %0, %1, %cst {dimension_numbers = #tpu.dot_dimension_numbers<[1], [0], [0], [1], [0, 0, 1, 1], [], []>} : vector<8x128xf32>, vector<128x256xf32>, vector<8x256xf32> -> vector<8x256xf32>
    %c0_3 = arith.constant 0 : index
    %c0_4 = arith.constant 0 : index
    %3 = vector.load %arg3[%c0_3, %c0_4] : memref<1x256xf32, #tpu.memory_space<vmem>>, vector<1x256xf32>
    %4 = vector.broadcast %3 : vector<1x256xf32> to vector<8x256xf32>
    %5 = arith.addf %2, %4 : vector<8x256xf32>
    %6 = vector.extract_strided_slice %5 {offsets = [0, 0], sizes = [8, 128], strides = [1, 1]} : vector<8x256xf32> to vector<8x128xf32>
    %cst_5 = arith.constant 0.000000e+00 : f32
    %7 = vector.broadcast %cst_5 : f32 to vector<8x128xf32>
    %8 = arith.cmpf ogt, %6, %7 : vector<8x128xf32>
    %cst_6 = arith.constant 1.000000e-01 : f32
    %9 = vector.broadcast %cst_6 : f32 to vector<8x128xf32>
    %10 = arith.mulf %9, %6 : vector<8x128xf32>
    %11 = arith.select %8, %6, %10 : vector<8x128xi1>, vector<8x128xf32>
    %12 = vector.extract_strided_slice %5 {offsets = [0, 128], sizes = [8, 128], strides = [1, 1]} : vector<8x256xf32> to vector<8x128xf32>
    %c0_7 = arith.constant 0 : index
    %c0_8 = arith.constant 0 : index
    %13 = vector.load %arg4[%c0_7, %c0_8] : memref<128x128xf32, #tpu.memory_space<vmem>>, vector<128x128xf32>
    %cst_9 = arith.constant dense<0.000000e+00> : vector<8x128xf32>
    %14 = tpu.matmul %11, %13, %cst_9 {dimension_numbers = #tpu.dot_dimension_numbers<[1], [0], [0], [1], [0, 0, 1, 1], [], []>} : vector<8x128xf32>, vector<128x128xf32>, vector<8x128xf32> -> vector<8x128xf32>
    %c0_10 = arith.constant 0 : index
    %c0_11 = arith.constant 0 : index
    %15 = vector.load %arg5[%c0_10, %c0_11] : memref<1x128xf32, #tpu.memory_space<vmem>>, vector<1x128xf32>
    %16 = vector.broadcast %15 : vector<1x128xf32> to vector<8x128xf32>
    %17 = arith.addf %14, %16 : vector<8x128xf32>
    %18 = arith.addf %17, %12 : vector<8x128xf32>
    %cst_12 = arith.constant 0.000000e+00 : f32
    %19 = vector.broadcast %cst_12 : f32 to vector<8x128xf32>
    %20 = arith.cmpf ogt, %18, %19 : vector<8x128xf32>
    %cst_13 = arith.constant 1.000000e-01 : f32
    %21 = vector.broadcast %cst_13 : f32 to vector<8x128xf32>
    %22 = arith.mulf %21, %18 : vector<8x128xf32>
    %23 = arith.select %20, %18, %22 : vector<8x128xi1>, vector<8x128xf32>
    %c0_14 = arith.constant 0 : index
    %c0_15 = arith.constant 0 : index
    %24 = vector.load %arg6[%c0_14, %c0_15] : memref<8x128xf32, #tpu.memory_space<vmem>>, vector<8x128xf32>
    tpu.vector_store %arg6[%c0_14, %c0_15], %23 {strides = array<i32>} : memref<8x128xf32, #tpu.memory_space<vmem>>, vector<8x128xf32>,
    return
  }
  func.func @transform_0(%arg0: i32) -> (i32, i32) {
    %c0_i32 = arith.constant 0 : i32
    %c0_i32_0 = arith.constant 0 : i32
    return %arg0, %c0_i32 : i32, i32
  }
  func.func @transform_1(%arg0: i32) -> (i32, i32) {
    %c0_i32 = arith.constant 0 : i32
    %c0_i32_0 = arith.constant 0 : i32
    %c0_i32_1 = arith.constant 0 : i32
    return %c0_i32, %c0_i32_0 : i32, i32
  }
  func.func @transform_2(%arg0: i32) -> (i32, i32) {
    %c0_i32 = arith.constant 0 : i32
    %c0_i32_0 = arith.constant 0 : i32
    %c0_i32_1 = arith.constant 0 : i32
    return %c0_i32, %c0_i32_0 : i32, i32
  }
  func.func @transform_3(%arg0: i32) -> (i32, i32) {
    %c0_i32 = arith.constant 0 : i32
    %c0_i32_0 = arith.constant 0 : i32
    %c0_i32_1 = arith.constant 0 : i32
    return %c0_i32, %c0_i32_0 : i32, i32
  }
  func.func @transform_4(%arg0: i32) -> (i32, i32) {
    %c0_i32 = arith.constant 0 : i32
    %c0_i32_0 = arith.constant 0 : i32
    %c0_i32_1 = arith.constant 0 : i32
    return %c0_i32, %c0_i32_0 : i32, i32
  }
  func.func @transform_5(%arg0: i32) -> (i32, i32) {
    %c0_i32 = arith.constant 0 : i32
    %c0_i32_0 = arith.constant 0 : i32
    return %arg0, %c0_i32 : i32, i32
  }
}

</mosaic_0001>

<llo_original>
// kernel: tpu_custom_call.1
$region0: #{tpu_custom_call.1}
  #allocation0 [shape = 'u32[]', space=smem, size = 0x4, offset = 0x4, fixed_abs, tag = 'smem constant byte address 0x4 - core index']
  #allocation1 [shape = 'u32[72,128]{1,0:T(1,128)}', space=vmem, size = 0x9000, scoped, tag = 'internal scratch']
  %s0 = inlined_call_operand.hbm [shape: f32[8,128], index: 0, kind: input, shape index: {}]
  %s1 = inlined_call_operand.hbm [shape: f32[128,256], index: 1, kind: input, shape index: {}]
  %s2 = inlined_call_operand.hbm [shape: f32[1,256], index: 2, kind: input, shape index: {}]
  %s3 = inlined_call_operand.hbm [shape: f32[128,128], index: 3, kind: input, shape index: {}]
  %s4 = inlined_call_operand.vmem [shape: f32[1,128], index: 4, kind: input, shape index: {}]
  %s5 = inlined_call_operand.hbm [shape: f32[8,128], index: 5, kind: output, shape index: {}]
  %s6 = sld [smem:[#allocation0]]
  $region46: #{tpu_custom_call.1} parent=0
    _
  %s8 = ssub.s32 1, %s6
  %s9 = scalar_select 0, %s8, %s6
  $region1: #{tpu_custom_call.1} parent=0
    #allocation2 [shape = 'u8[4096]{0}', space=vmem, size = 0x1000, scoped, tag = 'input window, operand 0, single buffered']
    #allocation3 [shape = 's32[1]{0}', space=sflag, size = 0x4, scoped, tag = 'scoped memory for tpu_custom_call.1']
    #allocation4 [shape = 's32[1]{0}', space=sflag, size = 0x4, scoped, tag = 'scoped memory for tpu_custom_call.1']
    #allocation5 [shape = 'u8[131072]{0}', space=vmem, size = 0x20000, scoped, tag = 'input window, operand 1, single buffered']
    #allocation6 [shape = 's32[1]{0}', space=sflag, size = 0x4, scoped, tag = 'scoped memory for tpu_custom_call.1']
    #allocation7 [shape = 'u8[1024]{0}', space=vmem, size = 0x400, scoped, tag = 'input window, operand 2, single buffered']
    #allocation8 [shape = 'u8[65536]{0}', space=vmem, size = 0x10000, scoped, tag = 'input window, operand 3, single buffered']
    #allocation9 [shape = 's32[1]{0}', space=sflag, size = 0x4, scoped, tag = 'scoped memory for tpu_custom_call.1']
    #allocation10 [shape = 'u8[4096]{0}', space=vmem, size = 0x1000, scoped, tag = 'output window, operand 0, single buffered']
    %10 = vsyncpa [#allocation3], 0
    %11 = vsyncpa [#allocation6], 0
    %12 = vsyncpa [#allocation9], 0
    %13 = vsyncpa [#allocation4], 0
    // Predicated region
    $region2: #{tpu_custom_call.1} parent=1 // pred_check
      _
    $region3: #{tpu_custom_call.1} parent=1 // pred_check_branch
      %15 = sbr.rel (0) target = $region5
    $region4: #{tpu_custom_call.1} parent=1 // pred_region
      %17 = vsyncadd [#allocation3], 0
      %s19 = sshll.u32 %s0, 4
      %s20 = int_to_ptr.hbm [resolvable:$true] %s19
      %s21 = sshll.u32 [#allocation2], 4
      %s22 = int_to_ptr.vmem [resolvable:$true] %s21
      %24 = dma.hbm_to_vmem [thread:$0]  %s20, 128, %s22, [#allocation3]
    $region5: #{tpu_custom_call.1} parent=1 // pred_fallthru
      _
    // Predicated region
    $region6: #{tpu_custom_call.1} parent=1 // pred_check
      _
    $region7: #{tpu_custom_call.1} parent=1 // pred_check_branch
      %26 = sbr.rel (0) target = $region9
    $region8: #{tpu_custom_call.1} parent=1 // pred_region
      %28 = vsyncadd [#allocation6], 0
      %s29 = sshll.u32 %s1, 4
      %s30 = int_to_ptr.hbm [resolvable:$true] %s29
      %s31 = sshll.u32 [#allocation5], 4
      %s32 = int_to_ptr.vmem [resolvable:$true] %s31
      %37 = dma.hbm_to_vmem [thread:$0]  %s30, 4096, %s32, [#allocation6], 256, 256, 16
    $region9: #{tpu_custom_call.1} parent=1 // pred_fallthru
      _
    // Predicated region
    $region10: #{tpu_custom_call.1} parent=1 // pred_check
      _
    $region11: #{tpu_custom_call.1} parent=1 // pred_check_branch
      %39 = sbr.rel (0) target = $region13
    $region12: #{tpu_custom_call.1} parent=1 // pred_region
      %41 = vsyncadd [#allocation6], 0
      %s43 = sshll.u32 %s2, 4
      %s44 = int_to_ptr.hbm [resolvable:$true] %s43
      %s45 = sshll.u32 [#allocation7], 4
      %s46 = int_to_ptr.vmem [resolvable:$true] %s45
      %48 = dma.hbm_to_vmem [thread:$0]  %s44, 32, %s46, [#allocation6]
    $region13: #{tpu_custom_call.1} parent=1 // pred_fallthru
      _
    // Predicated region
    $region14: #{tpu_custom_call.1} parent=1 // pred_check
      _
    $region15: #{tpu_custom_call.1} parent=1 // pred_check_branch
      %50 = sbr.rel (0) target = $region17
    $region16: #{tpu_custom_call.1} parent=1 // pred_region
      %52 = vsyncadd [#allocation9], 0
      %s53 = sshll.u32 %s3, 4
      %s54 = int_to_ptr.hbm [resolvable:$true] %s53
      %s55 = sshll.u32 [#allocation8], 4
      %s56 = int_to_ptr.vmem [resolvable:$true] %s55
      %61 = dma.hbm_to_vmem [thread:$0]  %s54, 2048, %s56, [#allocation9], 128, 128, 8
    $region17: #{tpu_custom_call.1} parent=1 // pred_fallthru
      _
    // Predicated region
    $region18: #{tpu_custom_call.1} parent=1 // pred_check
      _
    $region19: #{tpu_custom_call.1} parent=1 // pred_check_branch
      %63 = sbr.rel (0) target = $region21
    $region20: #{tpu_custom_call.1} parent=1 // pred_region
      _
    $region21: #{tpu_custom_call.1} parent=1 // pred_fallthru
      _
    // Predicated region
    $region22: #{tpu_custom_call.1} parent=1 // pred_check
      _
    $region23: #{tpu_custom_call.1} parent=1 // pred_check_branch
      %65 = sbr.rel (0) target = $region25
    $region24: #{tpu_custom_call.1} parent=1 // pred_region
      %67 = dma.done [#allocation3], 128
    $region25: #{tpu_custom_call.1} parent=1 // pred_fallthru
      _
    // Predicated region
    $region26: #{tpu_custom_call.1} parent=1 // pred_check
      _
    $region27: #{tpu_custom_call.1} parent=1 // pred_check_branch
      %69 = sbr.rel (0) target = $region29
    $region28: #{tpu_custom_call.1} parent=1 // pred_region
      %71 = dma.done [#allocation6], 4096
    $region29: #{tpu_custom_call.1} parent=1 // pred_fallthru
      _
    // Predicated region
    $region30: #{tpu_custom_call.1} parent=1 // pred_check
      _
    $region31: #{tpu_custom_call.1} parent=1 // pred_check_branch
      %73 = sbr.rel (0) target = $region33
    $region32: #{tpu_custom_call.1} parent=1 // pred_region
      %75 = dma.done [#allocation6], 32
    $region33: #{tpu_custom_call.1} parent=1 // pred_fallthru
      _
    // Predicated region
    $region34: #{tpu_custom_call.1} parent=1 // pred_check
      _
    $region35: #{tpu_custom_call.1} parent=1 // pred_check_branch
      %77 = sbr.rel (0) target = $region37
    $region36: #{tpu_custom_call.1} parent=1 // pred_region
      %79 = dma.done [#allocation9], 2048
    $region37: #{tpu_custom_call.1} parent=1 // pred_fallthru
      _
    %v80 = vld [vmem:[#allocation2] sm:$0xff]
    %v81 = vld [vmem:[#allocation5] sm:$0xff]
    %v82 = vld [vmem:[#allocation5 + $0x8] sm:$0xff]
    %v83 = vld [vmem:[#allocation5 + $0x10] sm:$0xff]
    %v84 = vld [vmem:[#allocation5 + $0x18] sm:$0xff]
    %v85 = vld [vmem:[#allocation5 + $0x20] sm:$0xff]
    %v86 = vld [vmem:[#allocation5 + $0x28] sm:$0xff]
    %v87 = vld [vmem:[#allocation5 + $0x30] sm:$0xff]
    %v88 = vld [vmem:[#allocation5 + $0x38] sm:$0xff]
    %v89 = vld [vmem:[#allocation5 + $0x40] sm:$0xff]
    %v90 = vld [vmem:[#allocation5 + $0x48] sm:$0xff]
    %v91 = vld [vmem:[#allocation5 + $0x50] sm:$0xff]
    %v92 = vld [vmem:[#allocation5 + $0x58] sm:$0xff]
    %v93 = vld [vmem:[#allocation5 + $0x60] sm:$0xff]
    %v94 = vld [vmem:[#allocation5 + $0x68] sm:$0xff]
    %v95 = vld [vmem:[#allocation5 + $0x70] sm:$0xff]
    %v96 = vld [vmem:[#allocation5 + $0x78] sm:$0xff]
    %v97 = vld [vmem:[#allocation5 + $0x80] sm:$0xff]
    %v98 = vld [vmem:[#allocation5 + $0x88] sm:$0xff]
    %v99 = vld [vmem:[#allocation5 + $0x90] sm:$0xff]
    %v100 = vld [vmem:[#allocation5 + $0x98] sm:$0xff]
    %v101 = vld [vmem:[#allocation5 + $0xa0] sm:$0xff]
    %v102 = vld [vmem:[#allocation5 + $0xa8] sm:$0xff]
    %v103 = vld [vmem:[#allocation5 + $0xb0] sm:$0xff]
    %v104 = vld [vmem:[#allocation5 + $0xb8] sm:$0xff]
    %v105 = vld [vmem:[#allocation5 + $0xc0] sm:$0xff]
    %v106 = vld [vmem:[#allocation5 + $0xc8] sm:$0xff]
    %v107 = vld [vmem:[#allocation5 + $0xd0] sm:$0xff]
    %v108 = vld [vmem:[#allocation5 + $0xd8] sm:$0xff]
    %v109 = vld [vmem:[#allocation5 + $0xe0] sm:$0xff]
    %v110 = vld [vmem:[#allocation5 + $0xe8] sm:$0xff]
    %v111 = vld [vmem:[#allocation5 + $0xf0] sm:$0xff]
    %v112 = vld [vmem:[#allocation5 + $0xf8] sm:$0xff]
    %v113 = vld [vmem:[#allocation7] sm:$0x3]
    %v115 = vperm.slane %v113, 0
    %v116 = vperm.slane %v113, 1
    %119 = vmatpush.msra.mxu0 %v111
    %120 = vmatpush.msra.mxu0 %v109
    %121 = vmatpush.msra.mxu0 %v107
    %122 = vmatpush.msra.mxu0 %v105
    %123 = vmatpush.msra.mxu0 %v103
    %124 = vmatpush.msra.mxu0 %v101
    %125 = vmatpush.msra.mxu0 %v99
    %126 = vmatpush.msra.mxu0 %v97
    %127 = vmatpush.msra.mxu0 %v95
    %128 = vmatpush.msra.mxu0 %v93
    %129 = vmatpush.msra.mxu0 %v91
    %130 = vmatpush.msra.mxu0 %v89
    %131 = vmatpush.msra.mxu0 %v87
    %132 = vmatpush.msra.mxu0 %v85
    %133 = vmatpush.msra.mxu0 %v83
    %134 = vmatpush.msra.mxu0 %v81
    %135 = vmatmul.f32.gmra.mxu0 %v80
    %v136 = vpop.f32.mrf.mxu0
    %v137 = vadd.f32 %v115, %v136
    %138 = vdwg.mxu0
    %139 = vmatpush.msra.mxu0 %v112
    %140 = vmatpush.msra.mxu0 %v110
    %141 = vmatpush.msra.mxu0 %v108
    %142 = vmatpush.msra.mxu0 %v106
    %143 = vmatpush.msra.mxu0 %v104
    %144 = vmatpush.msra.mxu0 %v102
    %145 = vmatpush.msra.mxu0 %v100
    %146 = vmatpush.msra.mxu0 %v98
    %147 = vmatpush.msra.mxu0 %v96
    %148 = vmatpush.msra.mxu0 %v94
    %149 = vmatpush.msra.mxu0 %v92
    %150 = vmatpush.msra.mxu0 %v90
    %151 = vmatpush.msra.mxu0 %v88
    %152 = vmatpush.msra.mxu0 %v86
    %153 = vmatpush.msra.mxu0 %v84
    %154 = vmatpush.msra.mxu0 %v82
    %155 = vmatmul.f32.gmra.mxu0 %v80
    %v156 = vpop.f32.mrf.mxu0
    %v157 = vadd.f32 %v116, %v156
    %158 = vdwg.mxu0
    %vm159 = vcmp.gt.f32.partialorder %v137, 0.0
    %v160 = vmul.f32 %v137, 0.1
    %v161 = vsel %vm159, %v137, %v160
    %v162 = vld [vmem:[#allocation8] sm:$0xff]
    %v163 = vld [vmem:[#allocation8 + $0x8] sm:$0xff]
    %v164 = vld [vmem:[#allocation8 + $0x10] sm:$0xff]
    %v165 = vld [vmem:[#allocation8 + $0x18] sm:$0xff]
    %v166 = vld [vmem:[#allocation8 + $0x20] sm:$0xff]
    %v167 = vld [vmem:[#allocation8 + $0x28] sm:$0xff]
    %v168 = vld [vmem:[#allocation8 + $0x30] sm:$0xff]
    %v169 = vld [vmem:[#allocation8 + $0x38] sm:$0xff]
    %v170 = vld [vmem:[#allocation8 + $0x40] sm:$0xff]
    %v171 = vld [vmem:[#allocation8 + $0x48] sm:$0xff]
    %v172 = vld [vmem:[#allocation8 + $0x50] sm:$0xff]
    %v173 = vld [vmem:[#allocation8 + $0x58] sm:$0xff]
    %v174 = vld [vmem:[#allocation8 + $0x60] sm:$0xff]
    %v175 = vld [vmem:[#allocation8 + $0x68] sm:$0xff]
    %v176 = vld [vmem:[#allocation8 + $0x70] sm:$0xff]
    %v177 = vld [vmem:[#allocation8 + $0x78] sm:$0xff]
    %v178 = vld [vmem:[%s4] sm:$0x1]
    %v180 = vperm.slane %v178, 0
    %182 = vmatpush.msra.mxu0 %v177
    %183 = vmatpush.msra.mxu0 %v176
    %184 = vmatpush.msra.mxu0 %v175
    %185 = vmatpush.msra.mxu0 %v174
    %186 = vmatpush.msra.mxu0 %v173
    %187 = vmatpush.msra.mxu0 %v172
    %188 = vmatpush.msra.mxu0 %v171
    %189 = vmatpush.msra.mxu0 %v170
    %190 = vmatpush.msra.mxu0 %v169
    %191 = vmatpush.msra.mxu0 %v168
    %192 = vmatpush.msra.mxu0 %v167
    %193 = vmatpush.msra.mxu0 %v166
    %194 = vmatpush.msra.mxu0 %v165
    %195 = vmatpush.msra.mxu0 %v164
    %196 = vmatpush.msra.mxu0 %v163
    %197 = vmatpush.msra.mxu0 %v162
    %198 = vmatmul.f32.gmra.mxu0 %v161
    %v199 = vpop.f32.mrf.mxu0
    %v200 = vadd.f32 %v180, %v199
    %201 = vdwg.mxu0
    %v202 = vadd.f32 %v200, %v157
    %vm203 = vcmp.gt.f32.partialorder %v202, 0.0
    %v204 = vmul.f32 %v202, 0.1
    %v205 = vsel %vm203, %v202, %v204
    %206 = vst [vmem:[#allocation10] sm:$0xff] %v205
    // Predicated region
    $region38: #{tpu_custom_call.1} parent=1 // pred_check
      _
    $region39: #{tpu_custom_call.1} parent=1 // pred_check_branch
      %208 = sbr.rel (0) target = $region41
    $region40: #{tpu_custom_call.1} parent=1 // pred_region
      %210 = vsyncadd [#allocation4], 0
      %s212 = sshll.u32 [#allocation10], 4
      %s213 = int_to_ptr.vmem [resolvable:$true] %s212
      %s214 = sshll.u32 %s5, 4
      %s215 = int_to_ptr.hbm [resolvable:$true] %s214
      %217 = dma.vmem_to_hbm [thread:$0]  %s213, 128, %s215, [#allocation4]
    $region41: #{tpu_custom_call.1} parent=1 // pred_fallthru
      _
    // Predicated region
    $region42: #{tpu_custom_call.1} parent=1 // pred_check
      _
    $region43: #{tpu_custom_call.1} parent=1 // pred_check_branch
      %219 = sbr.rel (0) target = $region45
    $region44: #{tpu_custom_call.1} parent=1 // pred_region
      %221 = dma.done [#allocation4], 128
    $region45: #{tpu_custom_call.1} parent=1 // pred_fallthru
      _
    %222 = vsyncpa [#allocation3], 1
    %223 = vsyncpa [#allocation6], 1
    %224 = vsyncpa [#allocation9], 1
    %225 = vsyncpa [#allocation4], 1

</llo_original>
